<compile_context>
chip_gen: v7x
topology: tpu7x:2x2x1
jax: 0.10.0
libtpu: 0.0.40
codegen_flags: <defaults>
</compile_context>

<pallas_src>
import math

import numpy as np
import jax
import jax.numpy as jnp
from jax.experimental import pallas as pl
from jax.experimental.pallas import tpu as pltpu

# ---------------------------------------------------------------- graph (fixed, from the module source)
DST_ID = [1, 1, 2, 4, 0]
SRC_ID = [0, 3, 1, 1, 5]
DST_ID2 = DST_ID + SRC_ID          # 10 edges
SRC_ID2 = SRC_ID + DST_ID
NUM_NODES = max(max(DST_ID2), max(SRC_ID2)) + 1   # 6
NUM_EDGES = len(SRC_ID2)

EDGE_FEAT = 3          # g.edata['w'] width
SLAB_LANES = 128       # lane-aligned parameter slab width
NEG_SLOPE = 0.01       # PyTorch leaky_relu default


def _align8(x):
    """Round up to a sublane multiple so every slab section starts tile-aligned."""
    return ((x + 7) // 8) * 8


# ---------------------------------------------------------------- static graph -> compile-time constants
def build_graph_constants(src, dst, num_nodes):
    """Gather matrix G[e, src(e)] = 1 and mean-scatter matrix A[v, e] = 1/deg(v).

    Zero-in-degree nodes get an all-zero row in A -> h_N = 0 (matches DGL / the
    PyTorch reference).  Pure numpy: these become literal constants, never XLA ops.
    """
    src = np.asarray(src, dtype=np.int64)
    dst = np.asarray(dst, dtype=np.int64)
    num_edges = src.shape[0]

    gather = np.zeros((num_edges, num_nodes), dtype=np.float32)
    gather[np.arange(num_edges), src] = 1.0

    deg = np.zeros((num_nodes,), dtype=np.float32)
    np.add.at(deg, dst, 1.0)
    mean_scatter = np.zeros((num_nodes, num_edges), dtype=np.float32)
    for e in range(num_edges):
        mean_scatter[dst[e], e] = 1.0 / deg[dst[e]]
    return gather, mean_scatter


# ---------------------------------------------------------------- parameter packing (done once)
def prepare_params(W1, W2, b2, in_feat, inter_dim, out_feat, src, dst, num_nodes):
    """Pack G, A, split/pre-transposed W1, W2 and b2 into ONE lane-aligned slab.

    Each section starts on an 8-row (sublane) boundary; columns are padded to
    128 lanes.  Everything is assembled with numpy so the per-call wrapper has
    zero XLA ops and the whole forward pass is a single 3-operand pallas_call.
    """
    W1 = np.asarray(W1, dtype=np.float32)      # [inter_dim, in_feat + 3]
    W2 = np.asarray(W2, dtype=np.float32)      # [out_feat, in_feat + inter_dim]
    b2 = np.asarray(b2, dtype=np.float32)      # [out_feat]
    num_edges = len(src)

    gather, mean_scatter = build_graph_constants(src, dst, num_nodes)

    r_g = 0
    r_a = _align8(r_g + num_edges)
    r_w1h = _align8(r_a + num_nodes)
    r_w1w = _align8(r_w1h + in_feat)
    r_w2h = _align8(r_w1w + EDGE_FEAT)
    r_w2n = _align8(r_w2h + in_feat)
    r_b2 = _align8(r_w2n + inter_dim)
    total_rows = _align8(r_b2 + 1)

    slab = np.zeros((total_rows, SLAB_LANES), dtype=np.float32)
    slab[r_g:r_g + num_edges, :num_nodes] = gather                       # G   [E, N]
    slab[r_a:r_a + num_nodes, :num_edges] = mean_scatter                 # A   [N, E]
    slab[r_w1h:r_w1h + in_feat, :inter_dim] = W1[:, :in_feat].T          # W1h^T [F, I]
    slab[r_w1w:r_w1w + EDGE_FEAT, :inter_dim] = W1[:, in_feat:].T        # W1w^T [3, I]
    W2t = W2.T                                                           # [F + I, O]
    slab[r_w2h:r_w2h + in_feat, :out_feat] = W2t[:in_feat, :]            # W2h^T [F, O]
    slab[r_w2n:r_w2n + inter_dim, :out_feat] = W2t[in_feat:, :]          # W2n^T [I, O]
    slab[r_b2:r_b2 + 1, :out_feat] = b2.reshape(1, -1)                   # b2    [1, O]

    layout = dict(
        in_feat=in_feat, inter_dim=inter_dim, out_feat=out_feat,
        num_nodes=num_nodes, num_edges=num_edges,
        r_g=r_g, r_a=r_a, r_w1h=r_w1h, r_w1w=r_w1w,
        r_w2h=r_w2h, r_w2n=r_w2n, r_b2=r_b2,
    )
    return jnp.asarray(slab), layout


# ---------------------------------------------------------------- Pallas kernel (the whole forward pass)
def make_qconv_kernel(layout):
    """Kernel factory: static slab offsets / dims are baked in via closure."""
    F = layout["in_feat"]
    I = layout["inter_dim"]
    O = layout["out_feat"]
    N = layout["num_nodes"]
    E = layout["num_edges"]
    r_g, r_a = layout["r_g"], layout["r_a"]
    r_w1h, r_w1w = layout["r_w1h"], layout["r_w1w"]
    r_w2h, r_w2n, r_b2 = layout["r_w2h"], layout["r_w2n"], layout["r_b2"]

    def qconv_kernel(h_ref, we_ref, p_ref, out_ref):
        h = h_ref[...]                                                   # [N, F]
        we = we_ref[...]                                                 # [E, 3]

        # static slices of the single packed parameter slab
        gather = p_ref[r_g:r_g + E, :N]                                  # [E, N]
        mean_scatter = p_ref[r_a:r_a + N, :E]                            # [N, E]
        w1ht = p_ref[r_w1h:r_w1h + F, :I]                                # [F, I]
        w1wt = p_ref[r_w1w:r_w1w + EDGE_FEAT, :I]                        # [3, I]
        w2t_h = p_ref[r_w2h:r_w2h + F, :O]                               # [F, O]
        w2t_n = p_ref[r_w2n:r_w2n + I, :O]                               # [I, O]
        b2 = p_ref[r_b2:r_b2 + 1, :O]                                    # [1, O]

        # linear1 split into node part (through the constant gather matrix) and
        # edge part -> no [E, F+3] message is ever materialized.
        hw = jnp.dot(h, w1ht, preferred_element_type=jnp.float32)        # [N, I]
        s = (jnp.dot(gather, hw, preferred_element_type=jnp.float32)     # [E, I]
             + jnp.dot(we, w1wt, preferred_element_type=jnp.float32))
        tmp = jnp.where(s >= 0.0, s, NEG_SLOPE * s)                      # leaky_relu

        # per-destination mean over incoming edges via the (1/deg)-scaled constant.
        h_n = jnp.dot(mean_scatter, tmp, preferred_element_type=jnp.float32)  # [N, I]

        # linear2: concat([h, h_N]) @ W2^T + b2, expressed as two dots on static
        # slab sections (the h-part dot is independent of the h_N MXU chain).
        out = (jnp.dot(h, w2t_h, preferred_element_type=jnp.float32)
               + jnp.dot(h_n, w2t_n, preferred_element_type=jnp.float32)
               + b2)
        out_ref[...] = out.astype(out_ref.dtype)

    return qconv_kernel


# ---------------------------------------------------------------- wrapper: exactly one pallas_call
def qconv_forward(h, w_edge, params_slab, layout):
    # Whole-array VMEM operands: no grid, no index_maps, no double-buffering —
    # three prologue DMAs total (h, w_edge, packed params).
    vmem = pl.BlockSpec(memory_space=pltpu.MemorySpace.VMEM)
    return pl.pallas_call(
        make_qconv_kernel(layout),
        out_shape=jax.ShapeDtypeStruct(
            (layout["num_nodes"], layout["out_feat"]), jnp.float32),
        in_specs=[vmem, vmem, vmem],
        out_specs=vmem,
    )(h, w_edge, params_slab)


# ---------------------------------------------------------------- pure-JAX reference (correctness check)
def qconv_reference(h, w_edge, src, dst, num_nodes, W1, W2, b2):
    msg = jnp.concatenate([h[src], w_edge], axis=1)
    tmp = msg @ W1.T
    tmp = jnp.where(tmp >= 0.0, tmp, NEG_SLOPE * tmp)
    one_hot = (dst[None, :] == jnp.arange(num_nodes)[:, None]).astype(jnp.float32)
    deg = one_hot.sum(axis=1, keepdims=True)
    h_n = jnp.where(deg > 0.0, (one_hot @ tmp) / jnp.maximum(deg, 1.0), 0.0)
    return jnp.concatenate([h, h_n], axis=1) @ W2.T + b2


# ---------------------------------------------------------------- params (deterministic, shapes from __init__)
def init_params(key, in_feat, inter_dim, out_feat):
    k1, k2, k3 = jax.random.split(key, 3)
    gain = math.sqrt(2.0)  # nn.init.calculate_gain('relu')
    # linear1.weight: [inter_dim, in_feat+3], xavier_normal_(gain)
    fan_in1, fan_out1 = in_feat + 3, inter_dim
    std1 = gain * math.sqrt(2.0 / (fan_in1 + fan_out1))
    W1 = std1 * jax.random.normal(k1, (inter_dim, in_feat + 3), jnp.float32)
    # linear2.weight: [out_feat, in_feat+inter_dim], xavier_normal_(gain)
    fan_in2, fan_out2 = in_feat + inter_dim, out_feat
    std2 = gain * math.sqrt(2.0 / (fan_in2 + fan_out2))
    W2 = std2 * jax.random.normal(k2, (out_feat, in_feat + inter_dim), jnp.float32)
    # linear2.bias: default nn.Linear init, uniform(-1/sqrt(fan_in), 1/sqrt(fan_in))
    bound = 1.0 / math.sqrt(fan_in2)
    b2 = jax.random.uniform(k3, (out_feat,), jnp.float32, -bound, bound)
    return W1, W2, b2


if __name__ == "__main__":
    in_feat, inter_dim, out_feat = 8, 16, 8

    key = jax.random.PRNGKey(0)
    kp, kh, kw = jax.random.split(key, 3)
    W1, W2, b2 = init_params(kp, in_feat, inter_dim, out_feat)

    # pack static graph constants + weights into one lane-aligned slab (once)
    params_slab, layout = prepare_params(
        W1, W2, b2, in_feat, inter_dim, out_feat, SRC_ID2, DST_ID2, NUM_NODES)

    h = jax.random.normal(kh, (NUM_NODES, in_feat), jnp.float32)      # node features
    w_edge = jax.random.normal(kw, (NUM_EDGES, EDGE_FEAT), jnp.float32)  # edge features g.edata['w']

    out = qconv_forward(h, w_edge, params_slab, layout)
    out = jax.block_until_ready(out)

    src = jnp.array(SRC_ID2, dtype=jnp.int32)
    dst = jnp.array(DST_ID2, dtype=jnp.int32)
    ref = qconv_reference(h, w_edge, src, dst, NUM_NODES, W1, W2, b2)
    assert out.shape == (NUM_NODES, out_feat)
    assert jnp.allclose(out, ref, atol=1e-4, rtol=1e-4), "mismatch vs reference"

    print("KERNEL_OK")
</pallas_src>

<mosaic_0001>
module attributes {stable_mosaic.version = 11 : i64} {
  func.func @qconv_kernel(%arg0: memref<6x8xf32, #tpu.memory_space<vmem>>, %arg1: memref<10x3xf32, #tpu.memory_space<vmem>>, %arg2: memref<72x128xf32, #tpu.memory_space<vmem>>, %arg3: memref<6x8xf32, #tpu.memory_space<vmem>>) attributes {dimension_semantics = [], scalar_prefetch = 0 : i64, scratch_operands = 0 : i64, tpu.core_type = #tpu.core_type<tc>} {
    %c0 = arith.constant 0 : index
    %c0_0 = arith.constant 0 : index
    %0 = vector.load %arg0[%c0, %c0_0] : memref<6x8xf32, #tpu.memory_space<vmem>>, vector<6x8xf32>
    %c0_1 = arith.constant 0 : index
    %c0_2 = arith.constant 0 : index
    %1 = vector.load %arg1[%c0_1, %c0_2] : memref<10x3xf32, #tpu.memory_space<vmem>>, vector<10x3xf32>
    %c0_3 = arith.constant 0 : index
    %c0_4 = arith.constant 0 : index
    %2 = vector.load %arg2[%c0_3, %c0_4] : memref<72x128xf32, #tpu.memory_space<vmem>>, vector<10x6xf32>
    %c16 = arith.constant 16 : index
    %c0_5 = arith.constant 0 : index
    %3 = vector.load %arg2[%c16, %c0_5] : memref<72x128xf32, #tpu.memory_space<vmem>>, vector<6x10xf32>
    %c24 = arith.constant 24 : index
    %c0_6 = arith.constant 0 : index
    %4 = vector.load %arg2[%c24, %c0_6] : memref<72x128xf32, #tpu.memory_space<vmem>>, vector<8x16xf32>
    %c32 = arith.constant 32 : index
    %c0_7 = arith.constant 0 : index
    %5 = vector.load %arg2[%c32, %c0_7] : memref<72x128xf32, #tpu.memory_space<vmem>>, vector<3x16xf32>
    %c40 = arith.constant 40 : index
    %c0_8 = arith.constant 0 : index
    %6 = vector.load %arg2[%c40, %c0_8] : memref<72x128xf32, #tpu.memory_space<vmem>>, vector<8x8xf32>
    %c48 = arith.constant 48 : index
    %c0_9 = arith.constant 0 : index
    %7 = vector.load %arg2[%c48, %c0_9] : memref<72x128xf32, #tpu.memory_space<vmem>>, vector<16x8xf32>
    %c64 = arith.constant 64 : index
    %c0_10 = arith.constant 0 : index
    %8 = vector.load %arg2[%c64, %c0_10] : memref<72x128xf32, #tpu.memory_space<vmem>>, vector<1x8xf32>
    %cst = arith.constant dense<0.000000e+00> : vector<6x16xf32>
    %9 = tpu.matmul %0, %4, %cst {dimension_numbers = #tpu.dot_dimension_numbers<[1], [0], [0], [1], [0, 0, 1, 1], [], []>} : vector<6x8xf32>, vector<8x16xf32>, vector<6x16xf32> -> vector<6x16xf32>
    %cst_11 = arith.constant dense<0.000000e+00> : vector<10x16xf32>
    %10 = tpu.matmul %2, %9, %cst_11 {dimension_numbers = #tpu.dot_dimension_numbers<[1], [0], [0], [1], [0, 0, 1, 1], [], []>} : vector<10x6xf32>, vector<6x16xf32>, vector<10x16xf32> -> vector<10x16xf32>
    %cst_12 = arith.constant dense<0.000000e+00> : vector<10x16xf32>
    %11 = tpu.matmul %1, %5, %cst_12 {dimension_numbers = #tpu.dot_dimension_numbers<[1], [0], [0], [1], [0, 0, 1, 1], [], []>} : vector<10x3xf32>, vector<3x16xf32>, vector<10x16xf32> -> vector<10x16xf32>
    %12 = arith.addf %10, %11 : vector<10x16xf32>
    %cst_13 = arith.constant 0.000000e+00 : f32
    %13 = vector.broadcast %cst_13 : f32 to vector<10x16xf32>
    %14 = arith.cmpf oge, %12, %13 : vector<10x16xf32>
    %cst_14 = arith.constant 0.00999999977 : f32
    %15 = vector.broadcast %cst_14 : f32 to vector<10x16xf32>
    %16 = arith.mulf %15, %12 : vector<10x16xf32>
    %17 = arith.select %14, %12, %16 : vector<10x16xi1>, vector<10x16xf32>
    %cst_15 = arith.constant dense<0.000000e+00> : vector<6x16xf32>
    %18 = tpu.matmul %3, %17, %cst_15 {dimension_numbers = #tpu.dot_dimension_numbers<[1], [0], [0], [1], [0, 0, 1, 1], [], []>} : vector<6x10xf32>, vector<10x16xf32>, vector<6x16xf32> -> vector<6x16xf32>
    %cst_16 = arith.constant dense<0.000000e+00> : vector<6x8xf32>
    %19 = tpu.matmul %0, %6, %cst_16 {dimension_numbers = #tpu.dot_dimension_numbers<[1], [0], [0], [1], [0, 0, 1, 1], [], []>} : vector<6x8xf32>, vector<8x8xf32>, vector<6x8xf32> -> vector<6x8xf32>
    %cst_17 = arith.constant dense<0.000000e+00> : vector<6x8xf32>
    %20 = tpu.matmul %18, %7, %cst_17 {dimension_numbers = #tpu.dot_dimension_numbers<[1], [0], [0], [1], [0, 0, 1, 1], [], []>} : vector<6x16xf32>, vector<16x8xf32>, vector<6x8xf32> -> vector<6x8xf32>
    %21 = arith.addf %19, %20 : vector<6x8xf32>
    %22 = vector.broadcast %8 : vector<1x8xf32> to vector<6x8xf32>
    %23 = arith.addf %21, %22 : vector<6x8xf32>
    %c0_18 = arith.constant 0 : index
    %c0_19 = arith.constant 0 : index
    %24 = vector.load %arg3[%c0_18, %c0_19] : memref<6x8xf32, #tpu.memory_space<vmem>>, vector<6x8xf32>
    tpu.vector_store %arg3[%c0_18, %c0_19], %23 {strides = array<i32>} : memref<6x8xf32, #tpu.memory_space<vmem>>, vector<6x8xf32>,
    return
  }
}

</mosaic_0001>

<llo_original>
// kernel: tpu_custom_call.1
$region0: #{tpu_custom_call.1}
  #allocation0 [shape = 'u32[]', space=smem, size = 0x4, offset = 0x4, fixed_abs, tag = 'smem constant byte address 0x4 - core index']
  #allocation1 [shape = 'u32[144,128]{1,0:T(1,128)}', space=vmem, size = 0x12000, scoped, tag = 'internal scratch']
  %s0 = inlined_call_operand.vmem [shape: f32[6,8], index: 0, kind: input, shape index: {}]
  %s1 = inlined_call_operand.vmem [shape: f32[10,3], index: 1, kind: input, shape index: {}]
  %s2 = inlined_call_operand.hbm [shape: f32[72,128], index: 2, kind: input, shape index: {}]
  %s3 = inlined_call_operand.hbm [shape: f32[6,8], index: 3, kind: output, shape index: {}]
  %s4 = sld [smem:[#allocation0]]
  $region26: #{tpu_custom_call.1} parent=0
    _
  %s6 = ssub.s32 1, %s4
  %s7 = scalar_select 0, %s6, %s4
  $region1: #{tpu_custom_call.1} parent=0
    #allocation2 [shape = 'u8[36864]{0}', space=vmem, size = 0x9000, scoped, tag = 'input window, operand 2, single buffered']
    #allocation3 [shape = 's32[1]{0}', space=sflag, size = 0x4, scoped, tag = 'scoped memory for tpu_custom_call.1']
    #allocation4 [shape = 's32[1]{0}', space=sflag, size = 0x4, scoped, tag = 'scoped memory for tpu_custom_call.1']
    #allocation5 [shape = 'u8[4096]{0}', space=vmem, size = 0x1000, scoped, tag = 'output window, operand 0, single buffered']
    %8 = vsyncpa [#allocation3], 0
    %9 = vsyncpa [#allocation4], 0
    // Predicated region
    $region2: #{tpu_custom_call.1} parent=1 // pred_check
      _
    $region3: #{tpu_custom_call.1} parent=1 // pred_check_branch
      %11 = sbr.rel (0) target = $region5
    $region4: #{tpu_custom_call.1} parent=1 // pred_region
      _
    $region5: #{tpu_custom_call.1} parent=1 // pred_fallthru
      _
    // Predicated region
    $region6: #{tpu_custom_call.1} parent=1 // pred_check
      _
    $region7: #{tpu_custom_call.1} parent=1 // pred_check_branch
      %13 = sbr.rel (0) target = $region9
    $region8: #{tpu_custom_call.1} parent=1 // pred_region
      _
    $region9: #{tpu_custom_call.1} parent=1 // pred_fallthru
      _
    // Predicated region
    $region10: #{tpu_custom_call.1} parent=1 // pred_check
      _
    $region11: #{tpu_custom_call.1} parent=1 // pred_check_branch
      %15 = sbr.rel (0) target = $region13
    $region12: #{tpu_custom_call.1} parent=1 // pred_region
      %s17 = ssub.s32 1152, 1152
      %18 = vsyncadd [#allocation3], %s17
      %s19 = sshll.u32 [#allocation2], 4
      %s20 = int_to_ptr.vmem [resolvable:$true] %s19
      %25 = dma.hbm_to_vmem [thread:$0]  %s2, 1152, %s20, [#allocation3], 128, 128, 8
    $region13: #{tpu_custom_call.1} parent=1 // pred_fallthru
      _
    // Predicated region
    $region14: #{tpu_custom_call.1} parent=1 // pred_check
      _
    $region15: #{tpu_custom_call.1} parent=1 // pred_check_branch
      %27 = sbr.rel (0) target = $region17
    $region16: #{tpu_custom_call.1} parent=1 // pred_region
      %28 = dma.done [#allocation3], 1152
    $region17: #{tpu_custom_call.1} parent=1 // pred_fallthru
      _
    %v29 = vld [vmem:[%s0] sm:$0x3f]
    %v30 = vld [vmem:[%s1] sm:$0xff]
    %v31 = vld [vmem:[%s1 + $0x8] sm:$0x3]
    %v32 = vld [vmem:[#allocation2] sm:$0xff]
    %v33 = vld [vmem:[#allocation2 + $0x8] sm:$0x3]
    %v34 = vld [vmem:[#allocation2 + $0x10] sm:$0x3f]
    %v35 = vld [vmem:[#allocation2 + $0x18] sm:$0xff]
    %v36 = vld [vmem:[#allocation2 + $0x20] sm:$0x7]
    %v37 = vld [vmem:[#allocation2 + $0x28] sm:$0xff]
    %v38 = vld [vmem:[#allocation2 + $0x30] sm:$0xff]
    %v39 = vld [vmem:[#allocation2 + $0x38] sm:$0xff]
    %v40 = vld [vmem:[#allocation2 + $0x40] sm:$0x1]
    %vm41 = vcmask 64512
    %v43 = vsel %vm41, %v29, 0
    %45 = vmatprep.subr.mxu0 0.0
    %46 = vmatpush1.msra.mxu0 %v35
    %47 = vmatprep.subr.mxu0 0.0
    %48 = vmatpush1.msra.mxu0 0.0
    %49 = vmatprep.subr.mxu0 0.0
    %50 = vmatpush1.msra.mxu0 0.0
    %51 = vmatprep.subr.mxu0 0.0
    %52 = vmatpush1.msra.mxu0 0.0
    %53 = vmatprep.subr.mxu0 0.0
    %54 = vmatpush1.msra.mxu0 0.0
    %55 = vmatprep.subr.mxu0 0.0
    %56 = vmatpush1.msra.mxu0 0.0
    %57 = vmatprep.subr.mxu0 0.0
    %58 = vmatpush1.msra.mxu0 0.0
    %59 = vmatprep.subr.mxu0 0.0
    %60 = vmatpush1.msra.mxu0 0.0
    %61 = vmatprep.subr.mxu0 0.0
    %62 = vmatpush1.msra.mxu0 0.0
    %63 = vmatprep.subr.mxu0 0.0
    %64 = vmatpush1.msra.mxu0 0.0
    %65 = vmatprep.subr.mxu0 0.0
    %66 = vmatpush1.msra.mxu0 0.0
    %67 = vmatprep.subr.mxu0 0.0
    %68 = vmatpush1.msra.mxu0 0.0
    %69 = vmatprep.subr.mxu0 0.0
    %70 = vmatpush1.msra.mxu0 0.0
    %71 = vmatprep.subr.mxu0 0.0
    %72 = vmatpush1.msra.mxu0 0.0
    %73 = vmatprep.subr.mxu0 0.0
    %74 = vmatpush1.msra.mxu0 0.0
    %75 = vmatprep.subr.mxu0 0.0
    %76 = vmatpush1.msra.mxu0 0.0
    %77 = vmatprep.subr.mxu0 0.0
    %78 = vmatpush1.msra.mxu0 0.0
    %79 = vmatprep.subr.mxu0 0.0
    %80 = vmatpush1.msra.mxu0 0.0
    %81 = vmatprep.subr.mxu0 0.0
    %82 = vmatpush1.msra.mxu0 0.0
    %83 = vmatprep.subr.mxu0 0.0
    %84 = vmatpush1.msra.mxu0 0.0
    %85 = vmatprep.subr.mxu0 0.0
    %86 = vmatpush1.msra.mxu0 0.0
    %87 = vmatprep.subr.mxu0 0.0
    %88 = vmatpush1.msra.mxu0 0.0
    %89 = vmatprep.subr.mxu0 0.0
    %90 = vmatpush1.msra.mxu0 0.0
    %91 = vmatprep.subr.mxu0 0.0
    %92 = vmatpush1.msra.mxu0 0.0
    %93 = vmatprep.subr.mxu0 0.0
    %94 = vmatpush1.msra.mxu0 0.0
    %95 = vmatprep.subr.mxu0 0.0
    %96 = vmatpush1.msra.mxu0 0.0
    %97 = vmatprep.subr.mxu0 0.0
    %98 = vmatpush1.msra.mxu0 0.0
    %99 = vmatprep.subr.mxu0 0.0
    %100 = vmatpush1.msra.mxu0 0.0
    %101 = vmatprep.subr.mxu0 0.0
    %102 = vmatpush1.msra.mxu0 0.0
    %103 = vmatprep.subr.mxu0 0.0
    %104 = vmatpush1.msra.mxu0 0.0
    %105 = vmatprep.subr.mxu0 0.0
    %106 = vmatpush1.msra.mxu0 0.0
    %107 = vmatprep.subr.mxu0 0.0
    %108 = vmatpush1.msra.mxu0 0.0
    %109 = vmatprep.mubr.f32.mxu0 0.0
    %110 = vmatmul.mubr.f32.gmra.mrb[0].mxu0 %v43
    %v111 = vpop.f32.mrb[0].mxu0
    %v112 = vadd.f32 0.0, %v111
    %v113 = vpop.f32.mrb[0].mxu0
    %114 = vdwg.mxu0
    %vm115 = vcmask 23552
    %v117 = vsel %vm115, %v30, 0
    %v120 = vsel %vm115, %v31, 0
    %vm122 = vcmask 1042432
    %v124 = vsel %vm122, %v36, 0
    %126 = vmatprep.subr.mxu0 0.0
    %127 = vmatpush1.msra.mxu0 %v124
    %128 = vmatprep.subr.mxu0 0.0
    %129 = vmatpush1.msra.mxu0 0.0
    %130 = vmatprep.subr.mxu0 0.0
    %131 = vmatpush1.msra.mxu0 0.0
    %132 = vmatprep.subr.mxu0 0.0
    %133 = vmatpush1.msra.mxu0 0.0
    %134 = vmatprep.subr.mxu0 0.0
    %135 = vmatpush1.msra.mxu0 0.0
    %136 = vmatprep.subr.mxu0 0.0
    %137 = vmatpush1.msra.mxu0 0.0
    %138 = vmatprep.subr.mxu0 0.0
    %139 = vmatpush1.msra.mxu0 0.0
    %140 = vmatprep.subr.mxu0 0.0
    %141 = vmatpush1.msra.mxu0 0.0
    %142 = vmatprep.subr.mxu0 0.0
    %143 = vmatpush1.msra.mxu0 0.0
    %144 = vmatprep.subr.mxu0 0.0
    %145 = vmatpush1.msra.mxu0 0.0
    %146 = vmatprep.subr.mxu0 0.0
    %147 = vmatpush1.msra.mxu0 0.0
    %148 = vmatprep.subr.mxu0 0.0
    %149 = vmatpush1.msra.mxu0 0.0
    %150 = vmatprep.subr.mxu0 0.0
    %151 = vmatpush1.msra.mxu0 0.0
    %152 = vmatprep.subr.mxu0 0.0
    %153 = vmatpush1.msra.mxu0 0.0
    %154 = vmatprep.subr.mxu0 0.0
    %155 = vmatpush1.msra.mxu0 0.0
    %156 = vmatprep.subr.mxu0 0.0
    %157 = vmatpush1.msra.mxu0 0.0
    %158 = vmatprep.subr.mxu0 0.0
    %159 = vmatpush1.msra.mxu0 0.0
    %160 = vmatprep.subr.mxu0 0.0
    %161 = vmatpush1.msra.mxu0 0.0
    %162 = vmatprep.subr.mxu0 0.0
    %163 = vmatpush1.msra.mxu0 0.0
    %164 = vmatprep.subr.mxu0 0.0
    %165 = vmatpush1.msra.mxu0 0.0
    %166 = vmatprep.subr.mxu0 0.0
    %167 = vmatpush1.msra.mxu0 0.0
    %168 = vmatprep.subr.mxu0 0.0
    %169 = vmatpush1.msra.mxu0 0.0
    %170 = vmatprep.subr.mxu0 0.0
    %171 = vmatpush1.msra.mxu0 0.0
    %172 = vmatprep.subr.mxu0 0.0
    %173 = vmatpush1.msra.mxu0 0.0
    %174 = vmatprep.subr.mxu0 0.0
    %175 = vmatpush1.msra.mxu0 0.0
    %176 = vmatprep.subr.mxu0 0.0
    %177 = vmatpush1.msra.mxu0 0.0
    %178 = vmatprep.subr.mxu0 0.0
    %179 = vmatpush1.msra.mxu0 0.0
    %180 = vmatprep.subr.mxu0 0.0
    %181 = vmatpush1.msra.mxu0 0.0
    %182 = vmatprep.subr.mxu0 0.0
    %183 = vmatpush1.msra.mxu0 0.0
    %184 = vmatprep.subr.mxu0 0.0
    %185 = vmatpush1.msra.mxu0 0.0
    %186 = vmatprep.subr.mxu0 0.0
    %187 = vmatpush1.msra.mxu0 0.0
    %188 = vmatprep.subr.mxu0 0.0
    %189 = vmatpush1.msra.mxu0 0.0
    %190 = vmatprep.mubr.f32.mxu0 0.0
    %191 = vmatmul.mubr.f32.gmra.mrb[0].mxu0 %v117
    %v192 = vpop.f32.mrb[0].mxu0
    %v193 = vadd.f32 0.0, %v192
    %v194 = vpop.f32.mrb[0].mxu0
    %195 = vmatprep.mubr.f32.mxu0 0.0
    %196 = vmatmul.mubr.f32.gmra.mrb[0].mxu0 %v120
    %v197 = vpop.f32.mrb[0].mxu0
    %v198 = vadd.f32 0.0, %v197
    %v199 = vpop.f32.mrb[0].mxu0
    %200 = vdwg.mxu0
    %vm201 = vcmask 48128
    %v203 = vsel %vm201, %v32, 0
    %v206 = vsel %vm201, %v33, 0
    %vm208 = vcmask 1045504
    %v210 = vsel %vm208, %v112, 0
    %212 = vmatprep.subr.mxu0 0.0
    %213 = vmatpush1.msra.mxu0 %v210
    %214 = vmatprep.subr.mxu0 0.0
    %215 = vmatpush1.msra.mxu0 0.0
    %216 = vmatprep.subr.mxu0 0.0
    %217 = vmatpush1.msra.mxu0 0.0
    %218 = vmatprep.subr.mxu0 0.0
    %219 = vmatpush1.msra.mxu0 0.0
    %220 = vmatprep.subr.mxu0 0.0
    %221 = vmatpush1.msra.mxu0 0.0
    %222 = vmatprep.subr.mxu0 0.0
    %223 = vmatpush1.msra.mxu0 0.0
    %224 = vmatprep.subr.mxu0 0.0
    %225 = vmatpush1.msra.mxu0 0.0
    %226 = vmatprep.subr.mxu0 0.0
    %227 = vmatpush1.msra.mxu0 0.0
    %228 = vmatprep.subr.mxu0 0.0
    %229 = vmatpush1.msra.mxu0 0.0
    %230 = vmatprep.subr.mxu0 0.0
    %231 = vmatpush1.msra.mxu0 0.0
    %232 = vmatprep.subr.mxu0 0.0
    %233 = vmatpush1.msra.mxu0 0.0
    %234 = vmatprep.subr.mxu0 0.0
    %235 = vmatpush1.msra.mxu0 0.0
    %236 = vmatprep.subr.mxu0 0.0
    %237 = vmatpush1.msra.mxu0 0.0
    %238 = vmatprep.subr.mxu0 0.0
    %239 = vmatpush1.msra.mxu0 0.0
    %240 = vmatprep.subr.mxu0 0.0
    %241 = vmatpush1.msra.mxu0 0.0
    %242 = vmatprep.subr.mxu0 0.0
    %243 = vmatpush1.msra.mxu0 0.0
    %244 = vmatprep.subr.mxu0 0.0
    %245 = vmatpush1.msra.mxu0 0.0
    %246 = vmatprep.subr.mxu0 0.0
    %247 = vmatpush1.msra.mxu0 0.0
    %248 = vmatprep.subr.mxu0 0.0
    %249 = vmatpush1.msra.mxu0 0.0
    %250 = vmatprep.subr.mxu0 0.0
    %251 = vmatpush1.msra.mxu0 0.0
    %252 = vmatprep.subr.mxu0 0.0
    %253 = vmatpush1.msra.mxu0 0.0
    %254 = vmatprep.subr.mxu0 0.0
    %255 = vmatpush1.msra.mxu0 0.0
    %256 = vmatprep.subr.mxu0 0.0
    %257 = vmatpush1.msra.mxu0 0.0
    %258 = vmatprep.subr.mxu0 0.0
    %259 = vmatpush1.msra.mxu0 0.0
    %260 = vmatprep.subr.mxu0 0.0
    %261 = vmatpush1.msra.mxu0 0.0
    %262 = vmatprep.subr.mxu0 0.0
    %263 = vmatpush1.msra.mxu0 0.0
    %264 = vmatprep.subr.mxu0 0.0
    %265 = vmatpush1.msra.mxu0 0.0
    %266 = vmatprep.subr.mxu0 0.0
    %267 = vmatpush1.msra.mxu0 0.0
    %268 = vmatprep.subr.mxu0 0.0
    %269 = vmatpush1.msra.mxu0 0.0
    %270 = vmatprep.subr.mxu0 0.0
    %271 = vmatpush1.msra.mxu0 0.0
    %272 = vmatprep.subr.mxu0 0.0
    %273 = vmatpush1.msra.mxu0 0.0
    %274 = vmatprep.subr.mxu0 0.0
    %275 = vmatpush1.msra.mxu0 0.0
    %276 = vmatprep.mubr.f32.mxu0 0.0
    %277 = vmatmul.mubr.f32.gmra.mrb[0].mxu0 %v203
    %v278 = vpop.f32.mrb[0].mxu0
    %v279 = vadd.f32 %v193, %v278
    %v280 = vpop.f32.mrb[0].mxu0
    %281 = vmatprep.mubr.f32.mxu0 0.0
    %282 = vmatmul.mubr.f32.gmra.mrb[0].mxu0 %v206
    %v283 = vpop.f32.mrb[0].mxu0
    %v284 = vadd.f32 %v198, %v283
    %v285 = vpop.f32.mrb[0].mxu0
    %286 = vdwg.mxu0
    %vm287 = vcmp.ge.f32.partialorder %v279, 0.0
    %vm288 = vcmp.ge.f32.partialorder %v284, 0.0
    %v289 = vmul.f32 %v279, 0.01
    %v290 = vmul.f32 %v284, 0.01
    %v291 = vsel %vm287, %v279, %v289
    %v292 = vsel %vm288, %v284, %v290
    %vm293 = vcmask 80896
    %v295 = vsel %vm293, %v34, 0
    %vm297 = vcmask 1041408
    %v299 = vsel %vm297, %v292, 0
    %301 = vmatprep.subr.mxu0 0.0
    %302 = vmatpush1.msra.mxu0 %v291
    %303 = vmatprep.subr.mxu0 0.0
    %304 = vmatpush1.msra.mxu0 %v299
    %305 = vmatprep.subr.mxu0 0.0
    %306 = vmatpush1.msra.mxu0 0.0
    %307 = vmatprep.subr.mxu0 0.0
    %308 = vmatpush1.msra.mxu0 0.0
    %309 = vmatprep.subr.mxu0 0.0
    %310 = vmatpush1.msra.mxu0 0.0
    %311 = vmatprep.subr.mxu0 0.0
    %312 = vmatpush1.msra.mxu0 0.0
    %313 = vmatprep.subr.mxu0 0.0
    %314 = vmatpush1.msra.mxu0 0.0
    %315 = vmatprep.subr.mxu0 0.0
    %316 = vmatpush1.msra.mxu0 0.0
    %317 = vmatprep.subr.mxu0 0.0
    %318 = vmatpush1.msra.mxu0 0.0
    %319 = vmatprep.subr.mxu0 0.0
    %320 = vmatpush1.msra.mxu0 0.0
    %321 = vmatprep.subr.mxu0 0.0
    %322 = vmatpush1.msra.mxu0 0.0
    %323 = vmatprep.subr.mxu0 0.0
    %324 = vmatpush1.msra.mxu0 0.0
    %325 = vmatprep.subr.mxu0 0.0
    %326 = vmatpush1.msra.mxu0 0.0
    %327 = vmatprep.subr.mxu0 0.0
    %328 = vmatpush1.msra.mxu0 0.0
    %329 = vmatprep.subr.mxu0 0.0
    %330 = vmatpush1.msra.mxu0 0.0
    %331 = vmatprep.subr.mxu0 0.0
    %332 = vmatpush1.msra.mxu0 0.0
    %333 = vmatprep.subr.mxu0 0.0
    %334 = vmatpush1.msra.mxu0 0.0
    %335 = vmatprep.subr.mxu0 0.0
    %336 = vmatpush1.msra.mxu0 0.0
    %337 = vmatprep.subr.mxu0 0.0
    %338 = vmatpush1.msra.mxu0 0.0
    %339 = vmatprep.subr.mxu0 0.0
    %340 = vmatpush1.msra.mxu0 0.0
    %341 = vmatprep.subr.mxu0 0.0
    %342 = vmatpush1.msra.mxu0 0.0
    %343 = vmatprep.subr.mxu0 0.0
    %344 = vmatpush1.msra.mxu0 0.0
    %345 = vmatprep.subr.mxu0 0.0
    %346 = vmatpush1.msra.mxu0 0.0
    %347 = vmatprep.subr.mxu0 0.0
    %348 = vmatpush1.msra.mxu0 0.0
    %349 = vmatprep.subr.mxu0 0.0
    %350 = vmatpush1.msra.mxu0 0.0
    %351 = vmatprep.subr.mxu0 0.0
    %352 = vmatpush1.msra.mxu0 0.0
    %353 = vmatprep.subr.mxu0 0.0
    %354 = vmatpush1.msra.mxu0 0.0
    %355 = vmatprep.subr.mxu0 0.0
    %356 = vmatpush1.msra.mxu0 0.0
    %357 = vmatprep.subr.mxu0 0.0
    %358 = vmatpush1.msra.mxu0 0.0
    %359 = vmatprep.subr.mxu0 0.0
    %360 = vmatpush1.msra.mxu0 0.0
    %361 = vmatprep.subr.mxu0 0.0
    %362 = vmatpush1.msra.mxu0 0.0
    %363 = vmatprep.subr.mxu0 0.0
    %364 = vmatpush1.msra.mxu0 0.0
    %365 = vmatprep.mubr.f32.mxu0 0.0
    %366 = vmatmul.mubr.f32.gmra.mrb[0].mxu0 %v295
    %v367 = vpop.f32.mrb[0].mxu0
    %v368 = vadd.f32 0.0, %v367
    %v369 = vpop.f32.mrb[0].mxu0
    %370 = vdwg.mxu0
    %vm371 = vcmask 130048
    %v373 = vsel %vm371, %v368, 0
    %375 = vmatprep.subr.mxu0 0.0
    %376 = vmatpush1.msra.mxu0 %v38
    %377 = vmatprep.subr.mxu0 0.0
    %378 = vmatpush1.msra.mxu0 %v39
    %379 = vmatprep.subr.mxu0 0.0
    %380 = vmatpush1.msra.mxu0 0.0
    %381 = vmatprep.subr.mxu0 0.0
    %382 = vmatpush1.msra.mxu0 0.0
    %383 = vmatprep.subr.mxu0 0.0
    %384 = vmatpush1.msra.mxu0 0.0
    %385 = vmatprep.subr.mxu0 0.0
    %386 = vmatpush1.msra.mxu0 0.0
    %387 = vmatprep.subr.mxu0 0.0
    %388 = vmatpush1.msra.mxu0 0.0
    %389 = vmatprep.subr.mxu0 0.0
    %390 = vmatpush1.msra.mxu0 0.0
    %391 = vmatprep.subr.mxu0 0.0
    %392 = vmatpush1.msra.mxu0 0.0
    %393 = vmatprep.subr.mxu0 0.0
    %394 = vmatpush1.msra.mxu0 0.0
    %395 = vmatprep.subr.mxu0 0.0
    %396 = vmatpush1.msra.mxu0 0.0
    %397 = vmatprep.subr.mxu0 0.0
    %398 = vmatpush1.msra.mxu0 0.0
    %399 = vmatprep.subr.mxu0 0.0
    %400 = vmatpush1.msra.mxu0 0.0
    %401 = vmatprep.subr.mxu0 0.0
    %402 = vmatpush1.msra.mxu0 0.0
    %403 = vmatprep.subr.mxu0 0.0
    %404 = vmatpush1.msra.mxu0 0.0
    %405 = vmatprep.subr.mxu0 0.0
    %406 = vmatpush1.msra.mxu0 0.0
    %407 = vmatprep.subr.mxu0 0.0
    %408 = vmatpush1.msra.mxu0 0.0
    %409 = vmatprep.subr.mxu0 0.0
    %410 = vmatpush1.msra.mxu0 0.0
    %411 = vmatprep.subr.mxu0 0.0
    %412 = vmatpush1.msra.mxu0 0.0
    %413 = vmatprep.subr.mxu0 0.0
    %414 = vmatpush1.msra.mxu0 0.0
    %415 = vmatprep.subr.mxu0 0.0
    %416 = vmatpush1.msra.mxu0 0.0
    %417 = vmatprep.subr.mxu0 0.0
    %418 = vmatpush1.msra.mxu0 0.0
    %419 = vmatprep.subr.mxu0 0.0
    %420 = vmatpush1.msra.mxu0 0.0
    %421 = vmatprep.subr.mxu0 0.0
    %422 = vmatpush1.msra.mxu0 0.0
    %423 = vmatprep.subr.mxu0 0.0
    %424 = vmatpush1.msra.mxu0 0.0
    %425 = vmatprep.subr.mxu0 0.0
    %426 = vmatpush1.msra.mxu0 0.0
    %427 = vmatprep.subr.mxu0 0.0
    %428 = vmatpush1.msra.mxu0 0.0
    %429 = vmatprep.subr.mxu0 0.0
    %430 = vmatpush1.msra.mxu0 0.0
    %431 = vmatprep.subr.mxu0 0.0
    %432 = vmatpush1.msra.mxu0 0.0
    %433 = vmatprep.subr.mxu0 0.0
    %434 = vmatpush1.msra.mxu0 0.0
    %435 = vmatprep.subr.mxu0 0.0
    %436 = vmatpush1.msra.mxu0 0.0
    %437 = vmatprep.subr.mxu0 0.0
    %438 = vmatpush1.msra.mxu0 0.0
    %439 = vmatprep.mubr.f32.mxu0 0.0
    %440 = vmatmul.mubr.f32.gmra.mrb[0].mxu0 %v373
    %v441 = vpop.f32.mrb[0].mxu0
    %v442 = vadd.f32 0.0, %v441
    %v443 = vpop.f32.mrb[0].mxu0
    %444 = vdwg.mxu0
    %445 = vmatprep.subr.mxu0 0.0
    %446 = vmatpush1.msra.mxu0 %v37
    %447 = vmatprep.subr.mxu0 0.0
    %448 = vmatpush1.msra.mxu0 0.0
    %449 = vmatprep.subr.mxu0 0.0
    %450 = vmatpush1.msra.mxu0 0.0
    %451 = vmatprep.subr.mxu0 0.0
    %452 = vmatpush1.msra.mxu0 0.0
    %453 = vmatprep.subr.mxu0 0.0
    %454 = vmatpush1.msra.mxu0 0.0
    %455 = vmatprep.subr.mxu0 0.0
    %456 = vmatpush1.msra.mxu0 0.0
    %457 = vmatprep.subr.mxu0 0.0
    %458 = vmatpush1.msra.mxu0 0.0
    %459 = vmatprep.subr.mxu0 0.0
    %460 = vmatpush1.msra.mxu0 0.0
    %461 = vmatprep.subr.mxu0 0.0
    %462 = vmatpush1.msra.mxu0 0.0
    %463 = vmatprep.subr.mxu0 0.0
    %464 = vmatpush1.msra.mxu0 0.0
    %465 = vmatprep.subr.mxu0 0.0
    %466 = vmatpush1.msra.mxu0 0.0
    %467 = vmatprep.subr.mxu0 0.0
    %468 = vmatpush1.msra.mxu0 0.0
    %469 = vmatprep.subr.mxu0 0.0
    %470 = vmatpush1.msra.mxu0 0.0
    %471 = vmatprep.subr.mxu0 0.0
    %472 = vmatpush1.msra.mxu0 0.0
    %473 = vmatprep.subr.mxu0 0.0
    %474 = vmatpush1.msra.mxu0 0.0
    %475 = vmatprep.subr.mxu0 0.0
    %476 = vmatpush1.msra.mxu0 0.0
    %477 = vmatprep.subr.mxu0 0.0
    %478 = vmatpush1.msra.mxu0 0.0
    %479 = vmatprep.subr.mxu0 0.0
    %480 = vmatpush1.msra.mxu0 0.0
    %481 = vmatprep.subr.mxu0 0.0
    %482 = vmatpush1.msra.mxu0 0.0
    %483 = vmatprep.subr.mxu0 0.0
    %484 = vmatpush1.msra.mxu0 0.0
    %485 = vmatprep.subr.mxu0 0.0
    %486 = vmatpush1.msra.mxu0 0.0
    %487 = vmatprep.subr.mxu0 0.0
    %488 = vmatpush1.msra.mxu0 0.0
    %489 = vmatprep.subr.mxu0 0.0
    %490 = vmatpush1.msra.mxu0 0.0
    %491 = vmatprep.subr.mxu0 0.0
    %492 = vmatpush1.msra.mxu0 0.0
    %493 = vmatprep.subr.mxu0 0.0
    %494 = vmatpush1.msra.mxu0 0.0
    %495 = vmatprep.subr.mxu0 0.0
    %496 = vmatpush1.msra.mxu0 0.0
    %497 = vmatprep.subr.mxu0 0.0
    %498 = vmatpush1.msra.mxu0 0.0
    %499 = vmatprep.subr.mxu0 0.0
    %500 = vmatpush1.msra.mxu0 0.0
    %501 = vmatprep.subr.mxu0 0.0
    %502 = vmatpush1.msra.mxu0 0.0
    %503 = vmatprep.subr.mxu0 0.0
    %504 = vmatpush1.msra.mxu0 0.0
    %505 = vmatprep.subr.mxu0 0.0
    %506 = vmatpush1.msra.mxu0 0.0
    %507 = vmatprep.subr.mxu0 0.0
    %508 = vmatpush1.msra.mxu0 0.0
    %509 = vmatprep.mubr.f32.mxu0 0.0
    %510 = vmatmul.mubr.f32.gmra.mrb[0].mxu0 %v43
    %v511 = vpop.f32.mrb[0].mxu0
    %v512 = vadd.f32 %v442, %v511
    %v513 = vpop.f32.mrb[0].mxu0
    %514 = vdwg.mxu0
    %v515 = vlaneseq
    %v516 = vshrl.u32 %v515, 7
    %v517 = vsub.s32 0, %v516
    %v518 = vrot.slane %v40, %v517
    %v519 = vadd.f32 %v512, %v518
    %vm520 = vcmask 62464
    %521 = vst.msk [vmem:[#allocation5] sm:$0x3f] %vm520, %v519
    // Predicated region
    $region18: #{tpu_custom_call.1} parent=1 // pred_check
      _
    $region19: #{tpu_custom_call.1} parent=1 // pred_check_branch
      %523 = sbr.rel (0) target = $region21
    $region20: #{tpu_custom_call.1} parent=1 // pred_region
      %s525 = ssub.s32 128, 128
      %526 = vsyncadd [#allocation4], %s525
      %s528 = sshll.u32 [#allocation5], 4
      %s529 = int_to_ptr.vmem [resolvable:$true] %s528
      %531 = dma.vmem_to_hbm [thread:$0]  %s529, 128, %s3, [#allocation4]
    $region21: #{tpu_custom_call.1} parent=1 // pred_fallthru
      _
    // Predicated region
    $region22: #{tpu_custom_call.1} parent=1 // pred_check
      _
    $region23: #{tpu_custom_call.1} parent=1 // pred_check_branch
      %533 = sbr.rel (0) target = $region25
    $region24: #{tpu_custom_call.1} parent=1 // pred_region
      %534 = dma.done [#allocation4], 128
    $region25: #{tpu_custom_call.1} parent=1 // pred_fallthru
      _
    %535 = vsyncpa [#allocation3], 1
    %536 = vsyncpa [#allocation4], 1

</llo_original>
